<compile_context>
chip_gen: v5e
topology: v5e:2x2
jax: 0.10.0
libtpu: 0.0.40
codegen_flags: <defaults>
</compile_context>

<pallas_src>
import jax
import jax.numpy as jnp
from jax.experimental import pallas as pl
from jax.experimental.pallas import tpu as pltpu


def _silu_kernel(x_ref, o_ref):
    # f32 compute: exp goes to the EUP slot, mul/add on the VPU; the kernel is
    # HBM-bound, so all compute is hidden under the DMA.
    xf = x_ref[...].astype(jnp.float32)
    y = xf * (1.0 / (1.0 + jnp.exp(-xf)))
    o_ref[...] = y.astype(o_ref.dtype)


# Candidate lane-dense widths (all multiples of 128), largest first.
_LANE_WIDTHS = (8192, 4096, 2048, 1024, 512, 256, 128)
# ~2 MiB per block per buffer: big enough to hide per-step overhead, small
# enough that in_spec + out_spec, double-buffered (4 buffers), fit every
# generation's scoped VMEM, including v7x.
_TARGET_BLOCK_BYTES = 2 * 1024 * 1024


def _row_tile(num_rows, cols, itemsize):
    # Account for lane padding in VMEM: a (r, cols) block occupies
    # r * roundup(cols, 128) * itemsize bytes regardless of the true cols.
    padded_cols = -(-cols // 128) * 128
    tile = max(8, (_TARGET_BLOCK_BYTES // (padded_cols * itemsize)) // 8 * 8)
    if num_rows <= tile:
        # Full-extent block on the row dim: always a legal block shape.
        return num_rows
    # Multiple of 8; the ragged trailing block is masked by Pallas.
    return tile


def _run_elementwise(x2d):
    rows, cols = x2d.shape
    tile_r = _row_tile(rows, cols, x2d.dtype.itemsize)
    grid = (pl.cdiv(rows, tile_r),)
    return pl.pallas_call(
        _silu_kernel,
        out_shape=jax.ShapeDtypeStruct((rows, cols), x2d.dtype),
        grid_spec=pltpu.PrefetchScalarGridSpec(
            num_scalar_prefetch=0,
            grid=grid,
            in_specs=[pl.BlockSpec((tile_r, cols), lambda i: (i, 0))],
            out_specs=pl.BlockSpec((tile_r, cols), lambda i: (i, 0)),
        ),
        compiler_params=pltpu.CompilerParams(
            dimension_semantics=("parallel",),
            vmem_limit_bytes=32 * 1024 * 1024,
        ),
    )(x2d)


def pallas_lambda_fn(x):
    """Applies the chosen lambda (SiLU) via a Pallas TPU kernel.

    Works for any array shape: element-wise op, so the tensor is flattened
    (free, row-major) and presented to the kernel as a lane-dense 2-D slab.
    """
    orig_shape = x.shape
    n = x.size
    if n == 0:
        return x

    # Preferred path: lane-dense reshape (last dim a large multiple of 128).
    # First try to also fill the sublane axis (rows % 8 == 0) for fully dense
    # vregs; then accept any exact factorization.  No padding is ever needed
    # because W divides N exactly.
    for require_full_sublanes in (True, False):
        for w in _LANE_WIDTHS:
            if n < w or n % w != 0:
                continue
            rows = n // w
            if require_full_sublanes and rows % 8 != 0:
                continue
            out = _run_elementwise(x.reshape(rows, w))
            return out.reshape(orig_shape)

    # Fallback (N not divisible by 128): keep the trailing feature dim as the
    # lane dim with a full-extent block there; still no jnp.pad pass — the
    # ragged row tail is masked by Pallas and tile sizing already accounts for
    # lane padding so VMEM stays within limits.
    cols = orig_shape[-1] if (len(orig_shape) >= 1 and orig_shape[-1] > 0) else n
    rows = n // cols
    out = _run_elementwise(x.reshape(rows, cols))
    return out.reshape(orig_shape)


class LambdaModule:
    """JAX/Pallas analogue of transformers4rec LambdaModule."""

    def __init__(self, lambda_fn):
        assert callable(lambda_fn)
        self.lambda_fn = lambda_fn

    def __call__(self, x):
        return self.lambda_fn(x)


if __name__ == "__main__":
    key = jax.random.PRNGKey(0)
    # Small shape consistent with sequential tabular data: (batch, seq, hidden)
    x = jax.random.normal(key, (2, 8, 32), dtype=jnp.float32)

    module = LambdaModule(pallas_lambda_fn)
    y = jax.block_until_ready(module(x))

    # Sanity check against a plain-JAX reference of the same lambda.
    ref = x * jax.nn.sigmoid(x)
    assert y.shape == x.shape and y.dtype == x.dtype
    assert jnp.allclose(y, ref, atol=1e-5, rtol=1e-5)

    # Also exercise a non-128-divisible shape to cover the fallback path.
    x2 = jax.random.normal(jax.random.PRNGKey(1), (3, 7, 33), dtype=jnp.float32)
    y2 = jax.block_until_ready(module(x2))
    ref2 = x2 * jax.nn.sigmoid(x2)
    assert jnp.allclose(y2, ref2, atol=1e-5, rtol=1e-5)

    print("KERNEL_OK")
</pallas_src>

<mosaic_0001>
module attributes {stable_mosaic.version = 11 : i64} {
  func.func @_silu_kernel(%arg0: i32, %arg1: memref<1x512xf32, #tpu.memory_space<vmem>>, %arg2: memref<1x512xf32, #tpu.memory_space<vmem>>) attributes {dimension_semantics = [#tpu.dimension_semantics<parallel>], iteration_bounds = array<i64: 1>, scalar_prefetch = 0 : i64, scratch_operands = 0 : i64, tpu.core_type = #tpu.core_type<tc>, window_params = [{transform_indices = @transform_0, window_bounds = array<i64: 1, 512>}, {transform_indices = @transform_1, window_bounds = array<i64: 1, 512>}]} {
    %c0 = arith.constant 0 : index
    %c0_0 = arith.constant 0 : index
    %0 = vector.load %arg1[%c0, %c0_0] : memref<1x512xf32, #tpu.memory_space<vmem>>, vector<1x512xf32>
    %cst = arith.constant 0.000000e+00 : f32
    %1 = vector.broadcast %cst : f32 to vector<1x512xf32>
    %2 = arith.subf %1, %0 : vector<1x512xf32>
    %3 = math.exp %2 : vector<1x512xf32>
    %cst_1 = arith.constant 1.000000e+00 : f32
    %4 = vector.broadcast %cst_1 : f32 to vector<1x512xf32>
    %5 = arith.addf %4, %3 : vector<1x512xf32>
    %cst_2 = arith.constant 1.000000e+00 : f32
    %6 = vector.broadcast %cst_2 : f32 to vector<1x512xf32>
    %7 = arith.divf %6, %5 : vector<1x512xf32>
    %8 = arith.mulf %0, %7 : vector<1x512xf32>
    %c0_3 = arith.constant 0 : index
    %c0_4 = arith.constant 0 : index
    %9 = vector.load %arg2[%c0_3, %c0_4] : memref<1x512xf32, #tpu.memory_space<vmem>>, vector<1x512xf32>
    tpu.vector_store %arg2[%c0_3, %c0_4], %8 {strides = array<i32>} : memref<1x512xf32, #tpu.memory_space<vmem>>, vector<1x512xf32>,
    return
  }
  func.func @transform_0(%arg0: i32) -> (i32, i32) {
    %c0_i32 = arith.constant 0 : i32
    %c0_i32_0 = arith.constant 0 : i32
    return %arg0, %c0_i32 : i32, i32
  }
  func.func @transform_1(%arg0: i32) -> (i32, i32) {
    %c0_i32 = arith.constant 0 : i32
    %c0_i32_0 = arith.constant 0 : i32
    return %arg0, %c0_i32 : i32, i32
  }
}

</mosaic_0001>

<llo_original>
// kernel: tpu_custom_call.1
$region0: #{tpu_custom_call.1}
  #allocation0 [shape = 'u32[]', space=smem, size = 0x4, offset = 0x4, fixed_abs, tag = 'smem constant byte address 0x4 - core index']
  #allocation1 [shape = 'u32[72,128]{1,0:T(1,128)}', space=vmem, size = 0x9000, scoped, tag = 'internal scratch']
  %s0 = inlined_call_operand.hbm [shape: f32[1,512], index: 0, kind: input, shape index: {}]
  %s1 = inlined_call_operand.hbm [shape: f32[1,512], index: 1, kind: output, shape index: {}]
  %s2 = sld [smem:[#allocation0]]
  $region18: #{tpu_custom_call.1} parent=0
    _
  %s4 = ssub.s32 1, %s2
  %s5 = scalar_select 0, %s4, %s2
  $region1: #{tpu_custom_call.1} parent=0
    #allocation2 [shape = 'u8[2048]{0}', space=vmem, size = 0x800, scoped, tag = 'input window, operand 0, single buffered']
    #allocation3 [shape = 's32[1]{0}', space=sflag, size = 0x4, scoped, tag = 'scoped memory for tpu_custom_call.1']
    #allocation4 [shape = 's32[1]{0}', space=sflag, size = 0x4, scoped, tag = 'scoped memory for tpu_custom_call.1']
    #allocation5 [shape = 'u8[2048]{0}', space=vmem, size = 0x800, scoped, tag = 'output window, operand 0, single buffered']
    %6 = vsyncpa [#allocation3], 0
    %7 = vsyncpa [#allocation4], 0
    // Predicated region
    $region2: #{tpu_custom_call.1} parent=1 // pred_check
      _
    $region3: #{tpu_custom_call.1} parent=1 // pred_check_branch
      %9 = sbr.rel (0) target = $region5
    $region4: #{tpu_custom_call.1} parent=1 // pred_region
      %11 = vsyncadd [#allocation3], 0
      %s13 = sshll.u32 %s0, 4
      %s14 = int_to_ptr.hbm [resolvable:$true] %s13
      %s15 = sshll.u32 [#allocation2], 4
      %s16 = int_to_ptr.vmem [resolvable:$true] %s15
      %18 = dma.hbm_to_vmem [thread:$0]  %s14, 64, %s16, [#allocation3]
    $region5: #{tpu_custom_call.1} parent=1 // pred_fallthru
      _
    // Predicated region
    $region6: #{tpu_custom_call.1} parent=1 // pred_check
      _
    $region7: #{tpu_custom_call.1} parent=1 // pred_check_branch
      %20 = sbr.rel (0) target = $region9
    $region8: #{tpu_custom_call.1} parent=1 // pred_region
      %22 = dma.done [#allocation3], 64
    $region9: #{tpu_custom_call.1} parent=1 // pred_fallthru
      _
    %v23 = vld [vmem:[#allocation2] sm:$0xf]
    %v24 = vsub.f32 0.0, %v23
    %v25 = vmul.f32 %v24, 1.442695
    %v26 = vpow.pop %v25
    %v27 = vadd.f32 %v26, 1.0
    %v28 = vrcp.pop %v27
    %v29 = vmul.f32 %v27, %v28
    %v30 = vsub.f32 1.0, %v29
    %v31 = vmul.f32 %v28, %v30
    %v32 = vadd.f32 %v28, %v31
    %vm33 = vweird.f32 %v27
    %vm34 = vweird.f32 %v28
    %vm35 = vmor %vm33, %vm34
    %v36 = vsel %vm35, %v28, %v32
    %v37 = vand.u32 2147483647, %v27
    %vm38 = vcmp.eq.f32.partialorder %v37, 8.507059e+37
    %v39 = vand.u32 %v27, 2147483648
    %v40 = vor.u32 1.1754944e-38, %v39
    %v41 = vsel %vm38, %v40, %v36
    %v42 = vmul.f32 1.0, %v41
    %v43 = vmul.f32 %v23, %v42
    %v44 = vlaneseq
    %vm45 = vcmp.ge.s32.totalorder %v44, 0
    %vm46 = vcmp.lt.s32.totalorder %v44, 512
    %vm47 = vmand %vm45, %vm46
    %48 = vst.msk [vmem:[#allocation5] sm:$0xf] %vm47, %v43
    // Predicated region
    $region10: #{tpu_custom_call.1} parent=1 // pred_check
      _
    $region11: #{tpu_custom_call.1} parent=1 // pred_check_branch
      %50 = sbr.rel (0) target = $region13
    $region12: #{tpu_custom_call.1} parent=1 // pred_region
      %52 = vsyncadd [#allocation4], 0
      %s54 = sshll.u32 [#allocation5], 4
      %s55 = int_to_ptr.vmem [resolvable:$true] %s54
      %s56 = sshll.u32 %s1, 4
      %s57 = int_to_ptr.hbm [resolvable:$true] %s56
      %59 = dma.vmem_to_hbm [thread:$0]  %s55, 64, %s57, [#allocation4]
    $region13: #{tpu_custom_call.1} parent=1 // pred_fallthru
      _
    // Predicated region
    $region14: #{tpu_custom_call.1} parent=1 // pred_check
      _
    $region15: #{tpu_custom_call.1} parent=1 // pred_check_branch
      %61 = sbr.rel (0) target = $region17
    $region16: #{tpu_custom_call.1} parent=1 // pred_region
      %63 = dma.done [#allocation4], 64
    $region17: #{tpu_custom_call.1} parent=1 // pred_fallthru
      _
    %64 = vsyncpa [#allocation3], 1
    %65 = vsyncpa [#allocation4], 1

</llo_original>
